<compile_context>
chip_gen: v6e
topology: v6e:2x2x1
jax: 0.10.0
libtpu: 0.0.40
codegen_flags: <defaults>
</compile_context>

<pallas_src>
import functools

import jax
import jax.numpy as jnp
import numpy as np
from jax.experimental import pallas as pl
from jax.experimental.pallas import tpu as pltpu


# ----------------------------------------------------------------------------
# Per-generation VMEM budget / tiling helpers
# ----------------------------------------------------------------------------
def _pad16(c):
    """Pad a channel (sublane) extent to the bf16 tile height."""
    return ((int(c) + 15) // 16) * 16


def _vmem_config():
    """(per-step tile budget, vmem_limit_bytes) derived from the chip's VMEM."""
    try:
        cap = pltpu.get_tpu_info().vmem_capacity_bytes
    except Exception:
        cap = 64 * 1024 * 1024                      # conservative fallback (v7x)
    if cap <= 64 * 1024 * 1024:                     # v7x: 64 MiB per TensorCore
        return 18 * 1024 * 1024, 44 * 1024 * 1024
    return 40 * 1024 * 1024, 100 * 1024 * 1024      # v5e / v6e: 128 MiB


def _pick_s_tile(S, in_rows, couts, budget, out_itemsize=2):
    """Pick the S tile (lane axis) for the MLP kernels.

    in_rows : padded sublane rows of the (double-buffered, bf16) input block(s).
    The tile stays a multiple of 128 (lane-dense) or the full extent for small S,
    and is shrunk until the padded VMEM-resident working set fits the budget."""
    if S % 128 != 0:
        return S
    cmax = _pad16(max(couts))
    cout = _pad16(couts[-1])

    def step_bytes(t):
        inp = 2 * in_rows * t * 2                  # double-buffered bf16 input block(s)
        outb = 2 * cout * t * out_itemsize         # double-buffered output block
        act = 3 * cmax * t * 4                     # live f32 intermediates
        acc = cout * t * 4                         # f32 max-accumulator scratch
        return inp + outb + act + acc + (1 << 20)  # + weights/shifts/sems reserve

    ts = S
    while ts > 128 and (ts // 2) % 128 == 0 and step_bytes(ts) > budget:
        ts //= 2
    return ts


# ----------------------------------------------------------------------------
# Pallas kernels
# ----------------------------------------------------------------------------
def _group_mlp_max_kernel(x_ref, *refs, num_layers, nsample):
    """Per-scale grouped MLP + max over the K neighbours (channel-first).

    x_ref : [1, K, Cin, ts] bf16 grouped points (channel-first slabs).
    refs  : (w_0, shift_0, ..., w_{L-1}, shift_{L-1}, slopes, out, acc)
            w_l     [Cout_l, Cin_l] bf16 (BN scale folded)
            shift_l [Cout_l, 1]     f32
            slopes  [L]             f32 PReLU slopes (SMEM)
            out     [1, Cout, ts]   bf16, ts on the lane axis (lane-dense store)
            acc     [Cout, ts]      f32 VMEM scratch (running neighbour max)
    """
    slopes_ref, out_ref, acc_ref = refs[-3], refs[-2], refs[-1]
    params = refs[:-3]

    ws = [params[2 * l][...] for l in range(num_layers)]
    shs = [params[2 * l + 1][...] for l in range(num_layers)]
    slopes = [slopes_ref[l] for l in range(num_layers)]

    # Fresh max accumulator for this (batch, S-tile) grid point.
    acc_ref[...] = jnp.full(acc_ref.shape, -jnp.inf, jnp.float32)

    for k in range(nsample):                 # K is small & static -> unrolled
        h = x_ref[0, k]                      # [Cin, ts] bf16, lane axis = ts
        for l in range(num_layers):
            h = jnp.dot(ws[l], h, preferred_element_type=jnp.float32) + shs[l]
            h = jnp.where(h > 0, h, slopes[l] * h)
            if l + 1 < num_layers:
                h = h.astype(jnp.bfloat16)
        # Running max over neighbours in a VMEM scratch (pure VPU, bounded vregs).
        acc_ref[...] = jnp.maximum(acc_ref[...], h)

    out_ref[0] = acc_ref[...].astype(out_ref.dtype)


def _final_mlp_kernel(*refs, num_scales, num_layers):
    """Final pointwise MLP; concat of the per-scale features is fused into the
    first layer as a sum of partial matmuls (no concat buffer in HBM).

    refs: (x_0..x_{S-1}, w0_0..w0_{S-1}, shift_0, w_1, shift_1, ..., slopes, out)
          x_i   [1, C_i, ts] bf16   per-scale features
          w0_i  [Cout0, C_i] bf16   first-layer weight slice for scale i
    """
    slopes_ref, out_ref = refs[-2], refs[-1]
    xs = refs[:num_scales]
    w0s = refs[num_scales:2 * num_scales]
    sh0_ref = refs[2 * num_scales]
    rest = refs[2 * num_scales + 1:-2]

    # Layer 0: sum of per-scale partial matmuls (== w0 @ concat(x_i)).
    h = jnp.dot(w0s[0][...], xs[0][0], preferred_element_type=jnp.float32)
    for i in range(1, num_scales):
        h = h + jnp.dot(w0s[i][...], xs[i][0], preferred_element_type=jnp.float32)
    h = h + sh0_ref[...]
    a0 = slopes_ref[0]
    h = jnp.where(h > 0, h, a0 * h)

    for l in range(1, num_layers):
        h = h.astype(jnp.bfloat16)
        w = rest[2 * (l - 1)][...]
        sh = rest[2 * (l - 1) + 1][...]
        a = slopes_ref[l]
        h = jnp.dot(w, h, preferred_element_type=jnp.float32) + sh
        h = jnp.where(h > 0, h, a * h)

    out_ref[0] = h.astype(out_ref.dtype)


# ----------------------------------------------------------------------------
# pallas_call wrappers
# ----------------------------------------------------------------------------
def run_group_mlp_max(grouped, weights, shifts, slopes):
    """grouped [B, K, Cin, S] bf16 (channel-first) -> per-scale [B, Cout, S] bf16."""
    B, K, Cin, S = grouped.shape
    couts = [int(sh.shape[0]) for sh in shifts]
    cout = couts[-1]
    budget, vmem_limit = _vmem_config()
    ts = _pick_s_tile(S, K * _pad16(Cin), couts, budget, out_itemsize=2)
    grid = (B, S // ts)

    in_specs = [pl.BlockSpec((1, K, Cin, ts), lambda b, s: (b, 0, 0, s))]
    args = [grouped]
    for w, sh in zip(weights, shifts):
        in_specs.append(pl.BlockSpec(w.shape, lambda b, s: (0, 0)))
        in_specs.append(pl.BlockSpec(sh.shape, lambda b, s: (0, 0)))
        args.extend((w, sh))
    in_specs.append(pl.BlockSpec(memory_space=pltpu.MemorySpace.SMEM))  # PReLU slopes
    args.append(slopes)

    return pl.pallas_call(
        functools.partial(_group_mlp_max_kernel, num_layers=len(weights), nsample=K),
        out_shape=jax.ShapeDtypeStruct((B, cout, S), jnp.bfloat16),
        grid=grid,
        in_specs=in_specs,
        out_specs=pl.BlockSpec((1, cout, ts), lambda b, s: (b, 0, s)),
        scratch_shapes=[pltpu.VMEM((cout, ts), jnp.float32)],   # neighbour-max acc
        compiler_params=pltpu.CompilerParams(
            dimension_semantics=("parallel", "parallel"),
            vmem_limit_bytes=vmem_limit),
    )(*args)


def run_final_mlp(xs, w0_parts, shift0, tail_ws, tail_shs, slopes,
                  out_dtype=jnp.float32):
    """xs: list of per-scale [B, C_i, S] bf16 -> [B, Cout, S] out_dtype.

    The concat is fused into the first layer via the per-scale weight slices."""
    B, _, S = xs[0].shape
    couts = [int(shift0.shape[0])] + [int(sh.shape[0]) for sh in tail_shs]
    cout = couts[-1]
    budget, vmem_limit = _vmem_config()
    in_rows = sum(_pad16(x.shape[1]) for x in xs)
    ts = _pick_s_tile(S, in_rows, couts, budget,
                      out_itemsize=jnp.dtype(out_dtype).itemsize)
    grid = (B, S // ts)

    in_specs, args = [], []
    for x in xs:
        ci = x.shape[1]
        in_specs.append(pl.BlockSpec((1, ci, ts), lambda b, s: (b, 0, s)))
        args.append(x)
    for wp in w0_parts:
        in_specs.append(pl.BlockSpec(wp.shape, lambda b, s: (0, 0)))
        args.append(wp)
    in_specs.append(pl.BlockSpec(shift0.shape, lambda b, s: (0, 0)))
    args.append(shift0)
    for w, sh in zip(tail_ws, tail_shs):
        in_specs.append(pl.BlockSpec(w.shape, lambda b, s: (0, 0)))
        in_specs.append(pl.BlockSpec(sh.shape, lambda b, s: (0, 0)))
        args.extend((w, sh))
    in_specs.append(pl.BlockSpec(memory_space=pltpu.MemorySpace.SMEM))
    args.append(slopes)

    num_layers = 1 + len(tail_ws)
    return pl.pallas_call(
        functools.partial(_final_mlp_kernel, num_scales=len(xs), num_layers=num_layers),
        out_shape=jax.ShapeDtypeStruct((B, cout, S), out_dtype),
        grid=grid,
        in_specs=in_specs,
        out_specs=pl.BlockSpec((1, cout, ts), lambda b, s: (b, 0, s)),
        compiler_params=pltpu.CompilerParams(
            dimension_semantics=("parallel", "parallel"),
            vmem_limit_bytes=vmem_limit),
    )(*args)


# ----------------------------------------------------------------------------
# Pure-JAX references (test-only, mirror the kernel's bf16/f32 precision path)
# ----------------------------------------------------------------------------
def ref_group_mlp_max(grouped, weights, shifts, slopes):
    B, K, Cin, S = grouped.shape
    L = len(weights)
    h = grouped.reshape(B * K, Cin, S)
    for l in range(L):
        h = jnp.einsum("oc,bcs->bos", weights[l], h,
                       preferred_element_type=jnp.float32) + shifts[l][None]
        h = jnp.where(h > 0, h, slopes[l] * h)
        if l + 1 < L:
            h = h.astype(jnp.bfloat16)
    h = h.reshape(B, K, -1, S).max(axis=1)          # max over neighbours (f32)
    return h.astype(jnp.bfloat16)                   # [B, Cout, S]


def ref_final_mlp(xs, w0_parts, shift0, tail_ws, tail_shs, slopes,
                  out_dtype=jnp.float32):
    x = jnp.concatenate(xs, axis=1)
    weights = [jnp.concatenate(w0_parts, axis=1)] + list(tail_ws)
    shifts = [shift0] + list(tail_shs)
    h = x
    L = len(weights)
    for l in range(L):
        h = jnp.einsum("oc,bcs->bos", weights[l], h,
                       preferred_element_type=jnp.float32) + shifts[l][None]
        h = jnp.where(h > 0, h, slopes[l] * h)
        if l + 1 < L:
            h = h.astype(jnp.bfloat16)
    return h.astype(out_dtype)


# ----------------------------------------------------------------------------
# PointNet++ sampling / grouping glue (plain JAX: gathers, sorting, index math)
# ----------------------------------------------------------------------------
def square_distance(src, dst):
    return (jnp.sum(src ** 2, -1)[:, :, None]
            + jnp.sum(dst ** 2, -1)[:, None, :]
            - 2.0 * jnp.einsum("bsc,bnc->bsn", src, dst))


def index_points(points, idx):
    batch = jnp.arange(points.shape[0]).reshape((-1,) + (1,) * (idx.ndim - 1))
    return points[batch, idx]


def _gather_cf(points_cf, gidx):
    """points_cf [B, C, N], gidx [B, K, S] int32 -> channel-first [B, K, C, S]."""
    B, C, N = points_cf.shape
    _, K, S = gidx.shape
    idx = jnp.broadcast_to(gidx[:, None, :, :], (B, C, K, S)).reshape(B, C, K * S)
    out = jnp.take_along_axis(points_cf, idx, axis=2)          # [B, C, K*S]
    return jnp.transpose(out.reshape(B, C, K, S), (0, 2, 1, 3))


def farthest_point_sample(xyz, npoint):
    # TODO(synk): PyTorch seeds the first centroid with torch.randint; we start
    # deterministically at index 0.  Sequential over npoint (O(npoint*B*N)).
    B, N, _ = xyz.shape
    centroids0 = jnp.zeros((B, npoint), jnp.int32)
    distance0 = jnp.full((B, N), 1e10, jnp.float32)
    farthest0 = jnp.zeros((B,), jnp.int32)

    def body(i, state):
        centroids, distance, farthest = state
        centroids = centroids.at[:, i].set(farthest)
        centroid = jnp.take_along_axis(xyz, farthest[:, None, None], axis=1)
        dist = jnp.sum((xyz - centroid) ** 2, -1)
        distance = jnp.minimum(distance, dist)
        farthest = jnp.argmax(distance, -1).astype(jnp.int32)
        return centroids, distance, farthest

    centroids, _, _ = jax.lax.fori_loop(0, npoint, body, (centroids0, distance0, farthest0))
    return centroids


def query_ball_point(radius, nsample, xyz, new_xyz):
    # TODO(synk): full [B,S,N] sort; replace with partial selection / Pallas ball
    # query for large N.  If a ball is empty the sentinel N survives and JAX
    # gather clamps it to N-1 (differs from PyTorch in that degenerate case).
    B, N, _ = xyz.shape
    S = new_xyz.shape[1]
    sqrdists = square_distance(new_xyz, xyz)
    group_idx = jnp.broadcast_to(jnp.arange(N, dtype=jnp.int32), (B, S, N))
    group_idx = jnp.where(sqrdists > radius ** 2, N, group_idx)
    group_idx = jnp.sort(group_idx, axis=-1)[:, :, :nsample]
    group_first = group_idx[:, :, :1]
    group_idx = jnp.where(group_idx == N, group_first, group_idx)
    return group_idx


# ----------------------------------------------------------------------------
# Parameters: 1x1 Conv + BN(eval, PyTorch defaults) + PReLU, BN scale folded in
# ----------------------------------------------------------------------------
def init_conv_bn_prelu(key, cin, cout, eps=1e-5):
    k1, k2 = jax.random.split(key)
    w = (jax.random.normal(k1, (cout, cin)) * 0.1).astype(jnp.float32)
    b = (jax.random.normal(k2, (cout,)) * 0.1).astype(jnp.float32)
    gamma = jnp.ones((cout,), jnp.float32)
    beta = jnp.zeros((cout,), jnp.float32)
    mean = jnp.zeros((cout,), jnp.float32)
    var = jnp.ones((cout,), jnp.float32)
    scale = gamma / jnp.sqrt(var + eps)
    w_eff = w * scale[:, None]                    # fold BN scale into conv weight (exact in eval)
    shift = (b - mean) * scale + beta
    return w_eff, shift, 0.25                     # PyTorch PReLU default slope


class PointNetMSGPallas:
    def __init__(self, npoint, radius_list, nsample_list, in_channel, mlp_list,
                 final_list, key, out_dtype=jnp.float32):
        # out_dtype=jnp.bfloat16 halves the final HBM writeback if downstream
        # consumers tolerate it; f32 kept as default for PyTorch parity.
        self.npoint = npoint
        self.radius_list = list(radius_list)
        self.nsample_list = list(nsample_list)
        self.out_dtype = out_dtype

        def build_stack(key, cin, channels):
            ws, shs, slopes = [], [], []
            last = cin
            for cout in channels:
                key, sub = jax.random.split(key)
                w_eff, shift, slope = init_conv_bn_prelu(sub, last, cout)
                ws.append(w_eff.astype(jnp.bfloat16))        # [Cout, Cin] channel-first
                shs.append(shift.reshape(cout, 1))
                slopes.append(slope)
                last = cout
            return key, ws, shs, jnp.asarray(slopes, jnp.float32)

        self.scale_params = []
        for mlp in mlp_list:
            key, ws, shs, sl = build_stack(key, in_channel + 3, mlp)
            self.scale_params.append((ws, shs, sl))

        concat_ch = sum(m[-1] for m in mlp_list)
        key, ws, shs, sl = build_stack(key, concat_ch, final_list)
        # Split the first final-layer weight per scale so the concat can be fused
        # into a sum of partial matmuls inside the final kernel.
        per_scale_c = [m[-1] for m in mlp_list]
        offs = np.cumsum([0] + per_scale_c)
        self.final_w0_parts = [ws[0][:, int(offs[i]):int(offs[i + 1])]
                               for i in range(len(per_scale_c))]
        self.final_shift0 = shs[0]
        self.final_tail_ws = ws[1:]
        self.final_tail_shs = shs[1:]
        self.final_slopes = sl

    def _sample(self, xyz, sampled_new_xyz):
        B, N, _ = xyz.shape
        if sampled_new_xyz is not None:
            return sampled_new_xyz
        if self.npoint != N:
            return index_points(xyz, farthest_point_sample(xyz, self.npoint))
        return xyz

    def _group_inputs(self, xyz, features, new_xyz):
        """Build channel-first grouped tensors [B, K, Cin, S] (bf16) per scale."""
        xyz_cf = jnp.transpose(xyz, (0, 2, 1))                    # [B, 3, N]
        new_xyz_cf = jnp.transpose(new_xyz, (0, 2, 1))            # [B, 3, S]
        feat_cf = None if features is None else jnp.transpose(features, (0, 2, 1))
        groups = []
        for i, radius in enumerate(self.radius_list):
            K = self.nsample_list[i]
            group_idx = query_ball_point(radius, K, xyz, new_xyz)  # [B, S, K]
            gidx = jnp.transpose(group_idx, (0, 2, 1))             # [B, K, S] (tiny)
            g_xyz = _gather_cf(xyz_cf, gidx) - new_xyz_cf[:, None]  # [B, K, 3, S]
            if feat_cf is not None:
                grouped = jnp.concatenate([_gather_cf(feat_cf, gidx), g_xyz], axis=2)
            else:
                grouped = g_xyz
            groups.append(grouped.astype(jnp.bfloat16))             # [B, K, Cin, S]
        return groups

    def __call__(self, xyz, features=None, sampled_new_xyz=None):
        new_xyz = self._sample(xyz, sampled_new_xyz)
        groups = self._group_inputs(xyz, features, new_xyz)
        per_scale = [run_group_mlp_max(g, *p)
                     for g, p in zip(groups, self.scale_params)]     # [B, C_i, S] bf16
        new_features = run_final_mlp(per_scale, self.final_w0_parts, self.final_shift0,
                                     self.final_tail_ws, self.final_tail_shs,
                                     self.final_slopes, self.out_dtype)
        return new_xyz, new_features                                 # PyTorch layout

    def reference(self, xyz, features=None, sampled_new_xyz=None):
        new_xyz = self._sample(xyz, sampled_new_xyz)
        groups = self._group_inputs(xyz, features, new_xyz)
        per_scale = [ref_group_mlp_max(g, *p)
                     for g, p in zip(groups, self.scale_params)]
        new_features = ref_final_mlp(per_scale, self.final_w0_parts, self.final_shift0,
                                     self.final_tail_ws, self.final_tail_shs,
                                     self.final_slopes, self.out_dtype)
        return new_xyz, new_features


if __name__ == "__main__":
    key = jax.random.PRNGKey(0)
    k_xyz, k_feat, k_params = jax.random.split(key, 3)

    B, N, D = 2, 16, 4           # batch, input points, feature channels
    S = 8                        # npoint (sampled points)
    radius_list = [0.4, 0.8]
    nsample_list = [4, 8]
    mlp_list = [[16, 32], [16, 32]]
    final_list = [64, 32]

    xyz = jax.random.uniform(k_xyz, (B, N, 3), jnp.float32)
    features = jax.random.normal(k_feat, (B, N, D), jnp.float32)

    model = PointNetMSGPallas(S, radius_list, nsample_list, D, mlp_list, final_list,
                              k_params)

    new_xyz, new_features = model(xyz, features)
    jax.block_until_ready((new_xyz, new_features))

    assert new_xyz.shape == (B, S, 3)
    assert new_features.shape == (B, final_list[-1], S)

    ref_xyz, ref_features = model.reference(xyz, features)
    np.testing.assert_allclose(np.asarray(new_xyz), np.asarray(ref_xyz))
    np.testing.assert_allclose(np.asarray(new_features), np.asarray(ref_features),
                               rtol=2e-2, atol=2e-3)
    print("KERNEL_OK")
</pallas_src>

<mosaic_0001>
module attributes {stable_mosaic.version = 11 : i64} {
  func.func @_group_mlp_max_kernel(%arg0: i32, %arg1: i32, %arg2: memref<1x4x7x8xbf16, #tpu.memory_space<vmem>>, %arg3: memref<16x7xbf16, #tpu.memory_space<vmem>>, %arg4: memref<16x1xf32, #tpu.memory_space<vmem>>, %arg5: memref<32x16xbf16, #tpu.memory_space<vmem>>, %arg6: memref<32x1xf32, #tpu.memory_space<vmem>>, %arg7: memref<2xf32, #tpu.memory_space<smem>>, %arg8: memref<1x32x8xbf16, #tpu.memory_space<vmem>>, %arg9: memref<32x8xf32, #tpu.memory_space<vmem>>) attributes {dimension_semantics = [#tpu.dimension_semantics<parallel>, #tpu.dimension_semantics<parallel>], iteration_bounds = array<i64: 2, 1>, scalar_prefetch = 0 : i64, scratch_operands = 1 : i64, tpu.core_type = #tpu.core_type<tc>, window_params = [{transform_indices = @transform_0, window_bounds = array<i64: 1, 4, 7, 8>}, {pipeline_mode = #tpu.pipeline_mode<synchronous>, transform_indices = @transform_1, window_bounds = array<i64: 16, 7>}, {pipeline_mode = #tpu.pipeline_mode<synchronous>, transform_indices = @transform_2, window_bounds = array<i64: 16, 1>}, {pipeline_mode = #tpu.pipeline_mode<synchronous>, transform_indices = @transform_3, window_bounds = array<i64: 32, 16>}, {pipeline_mode = #tpu.pipeline_mode<synchronous>, transform_indices = @transform_4, window_bounds = array<i64: 32, 1>}, {transform_indices = @transform_5, window_bounds = array<i64: 2>}, {transform_indices = @transform_6, window_bounds = array<i64: 1, 32, 8>}]} {
    %c0 = arith.constant 0 : index
    %c0_0 = arith.constant 0 : index
    %0 = vector.load %arg3[%c0, %c0_0] : memref<16x7xbf16, #tpu.memory_space<vmem>>, vector<16x7xbf16>
    %c0_1 = arith.constant 0 : index
    %c0_2 = arith.constant 0 : index
    %1 = vector.load %arg5[%c0_1, %c0_2] : memref<32x16xbf16, #tpu.memory_space<vmem>>, vector<32x16xbf16>
    %c0_3 = arith.constant 0 : index
    %c0_4 = arith.constant 0 : index
    %2 = vector.load %arg4[%c0_3, %c0_4] : memref<16x1xf32, #tpu.memory_space<vmem>>, vector<16x1xf32>
    %c0_5 = arith.constant 0 : index
    %c0_6 = arith.constant 0 : index
    %3 = vector.load %arg6[%c0_5, %c0_6] : memref<32x1xf32, #tpu.memory_space<vmem>>, vector<32x1xf32>
    %c0_7 = arith.constant 0 : index
    %4 = memref.load %arg7[%c0_7] : memref<2xf32, #tpu.memory_space<smem>>
    %c1 = arith.constant 1 : index
    %5 = memref.load %arg7[%c1] : memref<2xf32, #tpu.memory_space<smem>>
    %cst = arith.constant 0xFF800000 : f32
    %6 = vector.broadcast %cst : f32 to vector<32x8xf32>
    %c0_8 = arith.constant 0 : index
    %c0_9 = arith.constant 0 : index
    %7 = vector.load %arg9[%c0_8, %c0_9] : memref<32x8xf32, #tpu.memory_space<vmem>>, vector<32x8xf32>
    tpu.vector_store %arg9[%c0_8, %c0_9], %6 {strides = array<i32>} : memref<32x8xf32, #tpu.memory_space<vmem>>, vector<32x8xf32>,
    %c0_10 = arith.constant 0 : index
    %c0_11 = arith.constant 0 : index
    %c0_12 = arith.constant 0 : index
    %c0_13 = arith.constant 0 : index
    %8 = vector.load %arg2[%c0_10, %c0_11, %c0_12, %c0_13] : memref<1x4x7x8xbf16, #tpu.memory_space<vmem>>, vector<1x1x7x8xbf16>
    %9 = vector.shape_cast %8 : vector<1x1x7x8xbf16> to vector<7x8xbf16>
    %cst_14 = arith.constant dense<0.000000e+00> : vector<16x8xf32>
    %10 = tpu.matmul %0, %9, %cst_14 {dimension_numbers = #tpu.dot_dimension_numbers<[1], [0], [0], [1], [0, 0, 1, 1], [], []>} : vector<16x7xbf16>, vector<7x8xbf16>, vector<16x8xf32> -> vector<16x8xf32>
    %11 = vector.broadcast %2 : vector<16x1xf32> to vector<16x8xf32>
    %12 = arith.addf %10, %11 : vector<16x8xf32>
    %cst_15 = arith.constant 0.000000e+00 : f32
    %13 = vector.broadcast %cst_15 : f32 to vector<16x8xf32>
    %14 = arith.cmpf ogt, %12, %13 : vector<16x8xf32>
    %15 = vector.broadcast %4 : f32 to vector<16x8xf32>
    %16 = arith.mulf %15, %12 : vector<16x8xf32>
    %17 = arith.select %14, %12, %16 : vector<16x8xi1>, vector<16x8xf32>
    %18 = arith.truncf %17 : vector<16x8xf32> to vector<16x8xbf16>
    %cst_16 = arith.constant dense<0.000000e+00> : vector<32x8xf32>
    %19 = tpu.matmul %1, %18, %cst_16 {dimension_numbers = #tpu.dot_dimension_numbers<[1], [0], [0], [1], [0, 0, 1, 1], [], []>} : vector<32x16xbf16>, vector<16x8xbf16>, vector<32x8xf32> -> vector<32x8xf32>
    %20 = vector.broadcast %3 : vector<32x1xf32> to vector<32x8xf32>
    %21 = arith.addf %19, %20 : vector<32x8xf32>
    %cst_17 = arith.constant 0.000000e+00 : f32
    %22 = vector.broadcast %cst_17 : f32 to vector<32x8xf32>
    %23 = arith.cmpf ogt, %21, %22 : vector<32x8xf32>
    %24 = vector.broadcast %5 : f32 to vector<32x8xf32>
    %25 = arith.mulf %24, %21 : vector<32x8xf32>
    %26 = arith.select %23, %21, %25 : vector<32x8xi1>, vector<32x8xf32>
    %c0_18 = arith.constant 0 : index
    %c0_19 = arith.constant 0 : index
    %27 = vector.load %arg9[%c0_18, %c0_19] : memref<32x8xf32, #tpu.memory_space<vmem>>, vector<32x8xf32>
    %28 = arith.maximumf %27, %26 : vector<32x8xf32>
    %c0_20 = arith.constant 0 : index
    %c0_21 = arith.constant 0 : index
    %29 = vector.load %arg9[%c0_20, %c0_21] : memref<32x8xf32, #tpu.memory_space<vmem>>, vector<32x8xf32>
    tpu.vector_store %arg9[%c0_20, %c0_21], %28 {strides = array<i32>} : memref<32x8xf32, #tpu.memory_space<vmem>>, vector<32x8xf32>,
    %c0_22 = arith.constant 0 : index
    %c1_23 = arith.constant 1 : index
    %c0_24 = arith.constant 0 : index
    %c0_25 = arith.constant 0 : index
    %30 = vector.load %arg2[%c0_22, %c1_23, %c0_24, %c0_25] : memref<1x4x7x8xbf16, #tpu.memory_space<vmem>>, vector<1x1x7x8xbf16>
    %31 = vector.shape_cast %30 : vector<1x1x7x8xbf16> to vector<7x8xbf16>
    %cst_26 = arith.constant dense<0.000000e+00> : vector<16x8xf32>
    %32 = tpu.matmul %0, %31, %cst_26 {dimension_numbers = #tpu.dot_dimension_numbers<[1], [0], [0], [1], [0, 0, 1, 1], [], []>} : vector<16x7xbf16>, vector<7x8xbf16>, vector<16x8xf32> -> vector<16x8xf32>
    %33 = vector.broadcast %2 : vector<16x1xf32> to vector<16x8xf32>
    %34 = arith.addf %32, %33 : vector<16x8xf32>
    %cst_27 = arith.constant 0.000000e+00 : f32
    %35 = vector.broadcast %cst_27 : f32 to vector<16x8xf32>
    %36 = arith.cmpf ogt, %34, %35 : vector<16x8xf32>
    %37 = vector.broadcast %4 : f32 to vector<16x8xf32>
    %38 = arith.mulf %37, %34 : vector<16x8xf32>
    %39 = arith.select %36, %34, %38 : vector<16x8xi1>, vector<16x8xf32>
    %40 = arith.truncf %39 : vector<16x8xf32> to vector<16x8xbf16>
    %cst_28 = arith.constant dense<0.000000e+00> : vector<32x8xf32>
    %41 = tpu.matmul %1, %40, %cst_28 {dimension_numbers = #tpu.dot_dimension_numbers<[1], [0], [0], [1], [0, 0, 1, 1], [], []>} : vector<32x16xbf16>, vector<16x8xbf16>, vector<32x8xf32> -> vector<32x8xf32>
    %42 = vector.broadcast %3 : vector<32x1xf32> to vector<32x8xf32>
    %43 = arith.addf %41, %42 : vector<32x8xf32>
    %cst_29 = arith.constant 0.000000e+00 : f32
    %44 = vector.broadcast %cst_29 : f32 to vector<32x8xf32>
    %45 = arith.cmpf ogt, %43, %44 : vector<32x8xf32>
    %46 = vector.broadcast %5 : f32 to vector<32x8xf32>
    %47 = arith.mulf %46, %43 : vector<32x8xf32>
    %48 = arith.select %45, %43, %47 : vector<32x8xi1>, vector<32x8xf32>
    %c0_30 = arith.constant 0 : index
    %c0_31 = arith.constant 0 : index
    %49 = vector.load %arg9[%c0_30, %c0_31] : memref<32x8xf32, #tpu.memory_space<vmem>>, vector<32x8xf32>
    %50 = arith.maximumf %49, %48 : vector<32x8xf32>
    %c0_32 = arith.constant 0 : index
    %c0_33 = arith.constant 0 : index
    %51 = vector.load %arg9[%c0_32, %c0_33] : memref<32x8xf32, #tpu.memory_space<vmem>>, vector<32x8xf32>
    tpu.vector_store %arg9[%c0_32, %c0_33], %50 {strides = array<i32>} : memref<32x8xf32, #tpu.memory_space<vmem>>, vector<32x8xf32>,
    %c0_34 = arith.constant 0 : index
    %c2 = arith.constant 2 : index
    %c0_35 = arith.constant 0 : index
    %c0_36 = arith.constant 0 : index
    %52 = vector.load %arg2[%c0_34, %c2, %c0_35, %c0_36] : memref<1x4x7x8xbf16, #tpu.memory_space<vmem>>, vector<1x1x7x8xbf16>
    %53 = vector.shape_cast %52 : vector<1x1x7x8xbf16> to vector<7x8xbf16>
    %cst_37 = arith.constant dense<0.000000e+00> : vector<16x8xf32>
    %54 = tpu.matmul %0, %53, %cst_37 {dimension_numbers = #tpu.dot_dimension_numbers<[1], [0], [0], [1], [0, 0, 1, 1], [], []>} : vector<16x7xbf16>, vector<7x8xbf16>, vector<16x8xf32> -> vector<16x8xf32>
    %55 = vector.broadcast %2 : vector<16x1xf32> to vector<16x8xf32>
    %56 = arith.addf %54, %55 : vector<16x8xf32>
    %cst_38 = arith.constant 0.000000e+00 : f32
    %57 = vector.broadcast %cst_38 : f32 to vector<16x8xf32>
    %58 = arith.cmpf ogt, %56, %57 : vector<16x8xf32>
    %59 = vector.broadcast %4 : f32 to vector<16x8xf32>
    %60 = arith.mulf %59, %56 : vector<16x8xf32>
    %61 = arith.select %58, %56, %60 : vector<16x8xi1>, vector<16x8xf32>
    %62 = arith.truncf %61 : vector<16x8xf32> to vector<16x8xbf16>
    %cst_39 = arith.constant dense<0.000000e+00> : vector<32x8xf32>
    %63 = tpu.matmul %1, %62, %cst_39 {dimension_numbers = #tpu.dot_dimension_numbers<[1], [0], [0], [1], [0, 0, 1, 1], [], []>} : vector<32x16xbf16>, vector<16x8xbf16>, vector<32x8xf32> -> vector<32x8xf32>
    %64 = vector.broadcast %3 : vector<32x1xf32> to vector<32x8xf32>
    %65 = arith.addf %63, %64 : vector<32x8xf32>
    %cst_40 = arith.constant 0.000000e+00 : f32
    %66 = vector.broadcast %cst_40 : f32 to vector<32x8xf32>
    %67 = arith.cmpf ogt, %65, %66 : vector<32x8xf32>
    %68 = vector.broadcast %5 : f32 to vector<32x8xf32>
    %69 = arith.mulf %68, %65 : vector<32x8xf32>
    %70 = arith.select %67, %65, %69 : vector<32x8xi1>, vector<32x8xf32>
    %c0_41 = arith.constant 0 : index
    %c0_42 = arith.constant 0 : index
    %71 = vector.load %arg9[%c0_41, %c0_42] : memref<32x8xf32, #tpu.memory_space<vmem>>, vector<32x8xf32>
    %72 = arith.maximumf %71, %70 : vector<32x8xf32>
    %c0_43 = arith.constant 0 : index
    %c0_44 = arith.constant 0 : index
    %73 = vector.load %arg9[%c0_43, %c0_44] : memref<32x8xf32, #tpu.memory_space<vmem>>, vector<32x8xf32>
    tpu.vector_store %arg9[%c0_43, %c0_44], %72 {strides = array<i32>} : memref<32x8xf32, #tpu.memory_space<vmem>>, vector<32x8xf32>,
    %c0_45 = arith.constant 0 : index
    %c3 = arith.constant 3 : index
    %c0_46 = arith.constant 0 : index
    %c0_47 = arith.constant 0 : index
    %74 = vector.load %arg2[%c0_45, %c3, %c0_46, %c0_47] : memref<1x4x7x8xbf16, #tpu.memory_space<vmem>>, vector<1x1x7x8xbf16>
    %75 = vector.shape_cast %74 : vector<1x1x7x8xbf16> to vector<7x8xbf16>
    %cst_48 = arith.constant dense<0.000000e+00> : vector<16x8xf32>
    %76 = tpu.matmul %0, %75, %cst_48 {dimension_numbers = #tpu.dot_dimension_numbers<[1], [0], [0], [1], [0, 0, 1, 1], [], []>} : vector<16x7xbf16>, vector<7x8xbf16>, vector<16x8xf32> -> vector<16x8xf32>
    %77 = vector.broadcast %2 : vector<16x1xf32> to vector<16x8xf32>
    %78 = arith.addf %76, %77 : vector<16x8xf32>
    %cst_49 = arith.constant 0.000000e+00 : f32
    %79 = vector.broadcast %cst_49 : f32 to vector<16x8xf32>
    %80 = arith.cmpf ogt, %78, %79 : vector<16x8xf32>
    %81 = vector.broadcast %4 : f32 to vector<16x8xf32>
    %82 = arith.mulf %81, %78 : vector<16x8xf32>
    %83 = arith.select %80, %78, %82 : vector<16x8xi1>, vector<16x8xf32>
    %84 = arith.truncf %83 : vector<16x8xf32> to vector<16x8xbf16>
    %cst_50 = arith.constant dense<0.000000e+00> : vector<32x8xf32>
    %85 = tpu.matmul %1, %84, %cst_50 {dimension_numbers = #tpu.dot_dimension_numbers<[1], [0], [0], [1], [0, 0, 1, 1], [], []>} : vector<32x16xbf16>, vector<16x8xbf16>, vector<32x8xf32> -> vector<32x8xf32>
    %86 = vector.broadcast %3 : vector<32x1xf32> to vector<32x8xf32>
    %87 = arith.addf %85, %86 : vector<32x8xf32>
    %cst_51 = arith.constant 0.000000e+00 : f32
    %88 = vector.broadcast %cst_51 : f32 to vector<32x8xf32>
    %89 = arith.cmpf ogt, %87, %88 : vector<32x8xf32>
    %90 = vector.broadcast %5 : f32 to vector<32x8xf32>
    %91 = arith.mulf %90, %87 : vector<32x8xf32>
    %92 = arith.select %89, %87, %91 : vector<32x8xi1>, vector<32x8xf32>
    %c0_52 = arith.constant 0 : index
    %c0_53 = arith.constant 0 : index
    %93 = vector.load %arg9[%c0_52, %c0_53] : memref<32x8xf32, #tpu.memory_space<vmem>>, vector<32x8xf32>
    %94 = arith.maximumf %93, %92 : vector<32x8xf32>
    %c0_54 = arith.constant 0 : index
    %c0_55 = arith.constant 0 : index
    %95 = vector.load %arg9[%c0_54, %c0_55] : memref<32x8xf32, #tpu.memory_space<vmem>>, vector<32x8xf32>
    tpu.vector_store %arg9[%c0_54, %c0_55], %94 {strides = array<i32>} : memref<32x8xf32, #tpu.memory_space<vmem>>, vector<32x8xf32>,
    %c0_56 = arith.constant 0 : index
    %c0_57 = arith.constant 0 : index
    %96 = vector.load %arg9[%c0_56, %c0_57] : memref<32x8xf32, #tpu.memory_space<vmem>>, vector<32x8xf32>
    %97 = arith.truncf %96 : vector<32x8xf32> to vector<32x8xbf16>
    %c0_58 = arith.constant 0 : index
    %c0_59 = arith.constant 0 : index
    %c0_60 = arith.constant 0 : index
    %98 = vector.load %arg8[%c0_58, %c0_59, %c0_60] : memref<1x32x8xbf16, #tpu.memory_space<vmem>>, vector<1x32x8xbf16>
    %99 = vector.shape_cast %98 : vector<1x32x8xbf16> to vector<32x8xbf16>
    %100 = vector.shape_cast %97 : vector<32x8xbf16> to vector<1x32x8xbf16>
    tpu.vector_store %arg8[%c0_58, %c0_59, %c0_60], %100 {strides = array<i32>} : memref<1x32x8xbf16, #tpu.memory_space<vmem>>, vector<1x32x8xbf16>,
    return
  }
  func.func @transform_0(%arg0: i32, %arg1: i32) -> (i32, i32, i32, i32) {
    %c0_i32 = arith.constant 0 : i32
    %c0_i32_0 = arith.constant 0 : i32
    %c0_i32_1 = arith.constant 0 : i32
    return %arg0, %c0_i32, %c0_i32_0, %arg1 : i32, i32, i32, i32
  }
  func.func @transform_1(%arg0: i32, %arg1: i32) -> (i32, i32) {
    %c0_i32 = arith.constant 0 : i32
    %c0_i32_0 = arith.constant 0 : i32
    %c0_i32_1 = arith.constant 0 : i32
    return %c0_i32, %c0_i32_0 : i32, i32
  }
  func.func @transform_2(%arg0: i32, %arg1: i32) -> (i32, i32) {
    %c0_i32 = arith.constant 0 : i32
    %c0_i32_0 = arith.constant 0 : i32
    %c0_i32_1 = arith.constant 0 : i32
    return %c0_i32, %c0_i32_0 : i32, i32
  }
  func.func @transform_3(%arg0: i32, %arg1: i32) -> (i32, i32) {
    %c0_i32 = arith.constant 0 : i32
    %c0_i32_0 = arith.constant 0 : i32
    %c0_i32_1 = arith.constant 0 : i32
    return %c0_i32, %c0_i32_0 : i32, i32
  }
  func.func @transform_4(%arg0: i32, %arg1: i32) -> (i32, i32) {
    %c0_i32 = arith.constant 0 : i32
    %c0_i32_0 = arith.constant 0 : i32
    %c0_i32_1 = arith.constant 0 : i32
    return %c0_i32, %c0_i32_0 : i32, i32
  }
  func.func @transform_5(%arg0: i32, %arg1: i32) -> i32 {
    %c0_i32 = arith.constant 0 : i32
    %c0_i32_0 = arith.constant 0 : i32
    return %c0_i32 : i32
  }
  func.func @transform_6(%arg0: i32, %arg1: i32) -> (i32, i32, i32) {
    %c0_i32 = arith.constant 0 : i32
    %c0_i32_0 = arith.constant 0 : i32
    return %arg0, %c0_i32, %arg1 : i32, i32, i32
  }
}

</mosaic_0001>

<llo_original>
// kernel: tpu_custom_call.1
$region0: #{tpu_custom_call.1}
  #allocation0 [shape = 'u32[]', space=smem, size = 0x4, offset = 0x4, fixed_abs, tag = 'smem constant byte address 0x4 - core index']
  #allocation1 [shape = 'u32[144,128]{1,0:T(1,128)}', space=vmem, size = 0x12000, scoped, tag = 'internal scratch']
  #allocation2 [shape = 'f32[32,8]{1,0:T(8,128)}', space=vmem, size = 0x4000, scoped, tag = 'scratch operand']
  %s0 = inlined_call_operand.vmem [shape: bf16[2,4,7,8], index: 0, kind: input, shape index: {}]
  %s1 = inlined_call_operand.vmem [shape: bf16[16,7], index: 1, kind: input, shape index: {}]
  %s2 = inlined_call_operand.vmem [shape: f32[16,1], index: 2, kind: input, shape index: {}]
  %s3 = inlined_call_operand.vmem [shape: bf16[32,16], index: 3, kind: input, shape index: {}]
  %s4 = inlined_call_operand.vmem [shape: f32[32,1], index: 4, kind: input, shape index: {}]
  %s5 = inlined_call_operand.vmem [shape: f32[2], index: 5, kind: input, shape index: {}]
  %s6 = inlined_call_operand.vmem [shape: bf16[2,32,8], index: 6, kind: output, shape index: {}]
  %s7 = sld [smem:[#allocation0]]
  $region61: #{tpu_custom_call.1} parent=0
    _
  %s9 = ssub.s32 1, %s7
  %s10 = scalar_select 0, %s9, %s7
  $region1: #{tpu_custom_call.1} parent=0
    #allocation3 [shape = 'u8[512]{0}', space=smem, size = 0x200, scoped, tag = 'input window, operand 5, single buffered']
    #allocation4 [shape = 's32[2]{0}', space=sflag, size = 0x8, scoped, tag = 'scoped memory for tpu_custom_call.1']
    %11 = vsyncpa [#allocation4], 0
    loop: start=0, step=1, limit=4
    $region2: #{tpu_custom_call.1} parent=1 // loop_pre_header
      _
    $region3: #{tpu_custom_call.1} parent=1 // loop_header
      %s13 = sphi 0, %s17
      %p14 = scmp.ge.s32.totalorder %s13, 4
      %s20 = sphi 0, %s32
      %s21 = sphi 0, %s28
      %s22 = sphi 0, %s20
      %s23 = sphi 0, %s21
      %s24 = sphi 0, %s22
      %s25 = sphi 0, %s23
      %s37 = sphi 0, %s39
      %s40 = sphi 0, %s37
      %s41 = sphi 0, %s40
      %s57 = sphi 0, %s41
      %s61 = sphi 0, %s61
      %s63 = sphi 0, %s61
      %s64 = sphi 0, %s63
      %s78 = sphi 0, %s64
      %s82 = sphi 0, %s82
      %s84 = sphi 0, %s82
      %s85 = sphi 0, %s84
      %s99 = sphi 0, %s85
      %s103 = sphi 0, %s103
      %s105 = sphi 0, %s103
      %s106 = sphi 0, %s105
      %s120 = sphi 0, %s106
      %s124 = sphi 0, %s124
      %s126 = sphi 0, %s124
      %s127 = sphi 0, %s126
      %s141 = sphi 0, %s127
      %s145 = sphi 0, %s145
      %s147 = sphi 0, %s145
      %s148 = sphi 0, %s147
      %s162 = sphi 0, %s148
      %s170 = sphi 0, %s172
      %s173 = sphi 0, %s170
      %s174 = sphi 0, %s173
      %s190 = sphi 0, %s174
    $region4: #{tpu_custom_call.1} parent=1 // loop_header_branch
      %16 = sbr.rel (%p14) target = $region8
    $region5: #{tpu_custom_call.1} parent=1 // loop_body
      %s18 = ssub.s32 %s13, 1
      %s19 = ssub.s32 %s13, 2
      %s26 = sadd.s32 1, %s21
      %p27 = scmp.ge.s32.totalorder %s26, 1
      %s28 = scalar_select %p27, 0, %s26
      %s29 = sadd.s32 1, %s20
      %s30 = scalar_select %p27, %s29, %s20
      %p31 = scmp.ge.s32.totalorder %s30, 2
      %s32 = scalar_select %p31, 0, %s30
      %s33 = ssub.s32 %s20, %s32
      %s34 = ssub.s32 %s21, %s28
      %s35 = sor.u32 %s33, %s34
      %p36 = scmp.eq.s32.totalorder %s35, 0
      %s38 = sadd.s32 %s37, 1
      %s39 = scalar_select %p36, %s37, %s38
      %p42 = pneg %p36
      %p43 = scmp.eq.s32.totalorder %s13, 1
      %p44 = por %p42, %p43
      %p45 = scmp.ne.s32.totalorder %s37, %s40
      %p46 = scmp.eq.s32.totalorder %s13, 0
      %p47 = por %p45, %p46
      %p48 = scmp.ne.s32.totalorder %s37, %s40
      %p49 = scmp.eq.s32.totalorder %s18, 1
      %p50 = por %p48, %p49
      %p51 = scmp.ne.s32.totalorder %s40, %s41
      %p52 = scmp.eq.s32.totalorder %s18, 0
      %p53 = por %p51, %p52
      %p54 = scmp.ne.s32.totalorder %s40, %s41
      %p55 = scmp.eq.s32.totalorder %s19, 1
      %p56 = por %p54, %p55
      %p58 = scmp.ne.s32.totalorder %s41, %s57
      %p59 = scmp.eq.s32.totalorder %s19, 0
      %p60 = por %p58, %p59
      %s62 = sadd.s32 %s61, 1
      %p65 = scmp.eq.s32.totalorder %s13, 1
      %p66 = scmp.ne.s32.totalorder %s61, %s63
      %p67 = scmp.eq.s32.totalorder %s13, 0
      %p68 = por %p66, %p67
      %p69 = scmp.ne.s32.totalorder %s61, %s63
      %p70 = scmp.eq.s32.totalorder %s18, 1
      %p71 = por %p69, %p70
      %p72 = scmp.ne.s32.totalorder %s63, %s64
      %p73 = scmp.eq.s32.totalorder %s18, 0
      %p74 = por %p72, %p73
      %p75 = scmp.ne.s32.totalorder %s63, %s64
      %p76 = scmp.eq.s32.totalorder %s19, 1
      %p77 = por %p75, %p76
      %p79 = scmp.ne.s32.totalorder %s64, %s78
      %p80 = scmp.eq.s32.totalorder %s19, 0
      %p81 = por %p79, %p80
      %s83 = sadd.s32 %s82, 1
      %p86 = scmp.eq.s32.totalorder %s13, 1
      %p87 = scmp.ne.s32.totalorder %s82, %s84
      %p88 = scmp.eq.s32.totalorder %s13, 0
      %p89 = por %p87, %p88
      %p90 = scmp.ne.s32.totalorder %s82, %s84
      %p91 = scmp.eq.s32.totalorder %s18, 1
      %p92 = por %p90, %p91
      %p93 = scmp.ne.s32.totalorder %s84, %s85
      %p94 = scmp.eq.s32.totalorder %s18, 0
      %p95 = por %p93, %p94
      %p96 = scmp.ne.s32.totalorder %s84, %s85
      %p97 = scmp.eq.s32.totalorder %s19, 1
      %p98 = por %p96, %p97
      %p100 = scmp.ne.s32.totalorder %s85, %s99
      %p101 = scmp.eq.s32.totalorder %s19, 0
      %p102 = por %p100, %p101
      %s104 = sadd.s32 %s103, 1
      %p107 = scmp.eq.s32.totalorder %s13, 1
      %p108 = scmp.ne.s32.totalorder %s103, %s105
      %p109 = scmp.eq.s32.totalorder %s13, 0
      %p110 = por %p108, %p109
      %p111 = scmp.ne.s32.totalorder %s103, %s105
      %p112 = scmp.eq.s32.totalorder %s18, 1
      %p113 = por %p111, %p112
      %p114 = scmp.ne.s32.totalorder %s105, %s106
      %p115 = scmp.eq.s32.totalorder %s18, 0
      %p116 = por %p114, %p115
      %p117 = scmp.ne.s32.totalorder %s105, %s106
      %p118 = scmp.eq.s32.totalorder %s19, 1
      %p119 = por %p117, %p118
      %p121 = scmp.ne.s32.totalorder %s106, %s120
      %p122 = scmp.eq.s32.totalorder %s19, 0
      %p123 = por %p121, %p122
      %s125 = sadd.s32 %s124, 1
      %p128 = scmp.eq.s32.totalorder %s13, 1
      %p129 = scmp.ne.s32.totalorder %s124, %s126
      %p130 = scmp.eq.s32.totalorder %s13, 0
      %p131 = por %p129, %p130
      %p132 = scmp.ne.s32.totalorder %s124, %s126
      %p133 = scmp.eq.s32.totalorder %s18, 1
      %p134 = por %p132, %p133
      %p135 = scmp.ne.s32.totalorder %s126, %s127
      %p136 = scmp.eq.s32.totalorder %s18, 0
      %p137 = por %p135, %p136
      %p138 = scmp.ne.s32.totalorder %s126, %s127
      %p139 = scmp.eq.s32.totalorder %s19, 1
      %p140 = por %p138, %p139
      %p142 = scmp.ne.s32.totalorder %s127, %s141
      %p143 = scmp.eq.s32.totalorder %s19, 0
      %p144 = por %p142, %p143
      %s146 = sadd.s32 %s145, 1
      %p149 = scmp.eq.s32.totalorder %s13, 1
      %p150 = scmp.ne.s32.totalorder %s145, %s147
      %p151 = scmp.eq.s32.totalorder %s13, 0
      %p152 = por %p150, %p151
      %p153 = scmp.ne.s32.totalorder %s145, %s147
      %p154 = scmp.eq.s32.totalorder %s18, 1
      %p155 = por %p153, %p154
      %p156 = scmp.ne.s32.totalorder %s147, %s148
      %p157 = scmp.eq.s32.totalorder %s18, 0
      %p158 = por %p156, %p157
      %p159 = scmp.ne.s32.totalorder %s147, %s148
      %p160 = scmp.eq.s32.totalorder %s19, 1
      %p161 = por %p159, %p160
      %p163 = scmp.ne.s32.totalorder %s148, %s162
      %p164 = scmp.eq.s32.totalorder %s19, 0
      %p165 = por %p163, %p164
      %s166 = ssub.s32 %s20, %s32
      %s167 = ssub.s32 %s21, %s28
      %s168 = sor.u32 %s166, %s167
      %p169 = scmp.eq.s32.totalorder %s168, 0
      %s171 = sadd.s32 %s170, 1
      %s172 = scalar_select %p169, %s170, %s171
      %p175 = pneg %p169
      %p176 = scmp.eq.s32.totalorder %s13, 1
      %p177 = por %p175, %p176
      %p178 = scmp.ne.s32.totalorder %s170, %s173
      %p179 = scmp.eq.s32.totalorder %s13, 0
      %p180 = por %p178, %p179
      %p181 = scmp.ne.s32.totalorder %s170, %s173
      %p182 = scmp.eq.s32.totalorder %s18, 1
      %p183 = por %p181, %p182
      %p184 = scmp.ne.s32.totalorder %s173, %s174
      %p185 = scmp.eq.s32.totalorder %s18, 0
      %p186 = por %p184, %p185
      %p187 = scmp.ne.s32.totalorder %s173, %s174
      %p188 = scmp.eq.s32.totalorder %s19, 1
      %p189 = por %p187, %p188
      %p191 = scmp.ne.s32.totalorder %s174, %s190
      %p192 = scmp.eq.s32.totalorder %s19, 0
      %p193 = por %p191, %p192
      %p194 = scmp.le.s32.totalorder 1, %s13
      %p195 = scmp.lt.s32.totalorder %s13, 3
      %p196 = pnand %p194, %p195
      %p197 = pneg %p196
      // Predicated region
      $region9: #{tpu_custom_call.1} parent=5 // pred_check
        _
      $region10: #{tpu_custom_call.1} parent=5 // pred_check_branch
        %199 = sbr.rel (%p196) target = $region12
      $region11: #{tpu_custom_call.1} parent=5 // pred_region
        %s200 = ssub.s32 %s13, 1
        // Predicated region
        $region13: #{tpu_custom_call.1} parent=11 // pred_check
          %p201 = pneg %p74
        $region14: #{tpu_custom_call.1} parent=11 // pred_check_branch
          %203 = sbr.rel (%p201) target = $region16
        $region15: #{tpu_custom_call.1} parent=11 // pred_region
          _
        $region16: #{tpu_custom_call.1} parent=11 // pred_fallthru
          _
        // Predicated region
        $region17: #{tpu_custom_call.1} parent=11 // pred_check
          %p204 = pneg %p95
        $region18: #{tpu_custom_call.1} parent=11 // pred_check_branch
          %206 = sbr.rel (%p204) target = $region20
        $region19: #{tpu_custom_call.1} parent=11 // pred_region
          _
        $region20: #{tpu_custom_call.1} parent=11 // pred_fallthru
          _
        // Predicated region
        $region21: #{tpu_custom_call.1} parent=11 // pred_check
          %p207 = pneg %p116
        $region22: #{tpu_custom_call.1} parent=11 // pred_check_branch
          %209 = sbr.rel (%p207) target = $region24
        $region23: #{tpu_custom_call.1} parent=11 // pred_region
          _
        $region24: #{tpu_custom_call.1} parent=11 // pred_fallthru
          _
        // Predicated region
        $region25: #{tpu_custom_call.1} parent=11 // pred_check
          %p210 = pneg %p137
        $region26: #{tpu_custom_call.1} parent=11 // pred_check_branch
          %212 = sbr.rel (%p210) target = $region28
        $region27: #{tpu_custom_call.1} parent=11 // pred_region
          _
        $region28: #{tpu_custom_call.1} parent=11 // pred_fallthru
          _
        // Predicated region
        $region29: #{tpu_custom_call.1} parent=11 // pred_check
          %p213 = pneg %p158
        $region30: #{tpu_custom_call.1} parent=11 // pred_check_branch
          %215 = sbr.rel (%p213) target = $region32
        $region31: #{tpu_custom_call.1} parent=11 // pred_region
          %s217 = ssub.s32 16, 16
          %218 = vsyncadd [#allocation4], %s217
          %s220 = sshll.u32 %s5, 4
          %s221 = int_to_ptr.vmem [resolvable:$true] %s220
          %223 = dma.vmem_to_smem %s221, 16, [#allocation3], [#allocation4]
        $region32: #{tpu_custom_call.1} parent=11 // pred_fallthru
          _
      $region12: #{tpu_custom_call.1} parent=5 // pred_fallthru
        _
      %p224 = scmp.lt.s32.totalorder %s13, 2
      // Predicated region
      $region33: #{tpu_custom_call.1} parent=5 // pred_check
        %p225 = pneg %p224
      $region34: #{tpu_custom_call.1} parent=5 // pred_check_branch
        %227 = sbr.rel (%p225) target = $region36
      $region35: #{tpu_custom_call.1} parent=5 // pred_region
        // Predicated region
        $region37: #{tpu_custom_call.1} parent=35 // pred_check
          %p228 = pneg %p47
        $region38: #{tpu_custom_call.1} parent=35 // pred_check_branch
          %230 = sbr.rel (%p228) target = $region40
        $region39: #{tpu_custom_call.1} parent=35 // pred_region
          %p231 = scmp.lt.s32.totalorder %s20, 1
          %s232 = scalar_select %p231, %s20, 1
          %p233 = scmp.lt.s32.totalorder %s21, 0
          %s234 = scalar_select %p233, %s21, 0
          %s235 = smul.addr %s232, 4
          %s236 = sadd.s32 %s234, %s235
          %s237 = smul.addr %s236, 4
          %s238 = scalar_lea.vmem %s0, %s237
        $region40: #{tpu_custom_call.1} parent=35 // pred_fallthru
          _
      $region36: #{tpu_custom_call.1} parent=5 // pred_fallthru
        _
      %p239 = scmp.le.s32.totalorder 1, %s13
      %p240 = scmp.lt.s32.totalorder %s13, 3
      %p241 = pnand %p239, %p240
      %p242 = pneg %p241
      // Predicated region
      $region41: #{tpu_custom_call.1} parent=5 // pred_check
        _
      $region42: #{tpu_custom_call.1} parent=5 // pred_check_branch
        %244 = sbr.rel (%p241) target = $region44
      $region43: #{tpu_custom_call.1} parent=5 // pred_region
        %s245 = ssub.s32 %s13, 1
        // Predicated region
        $region45: #{tpu_custom_call.1} parent=43 // pred_check
          %p246 = pneg %p158
        $region46: #{tpu_custom_call.1} parent=43 // pred_check_branch
          %248 = sbr.rel (%p246) target = $region48
        $region47: #{tpu_custom_call.1} parent=43 // pred_region
          %249 = dma.done [#allocation4], 16
        $region48: #{tpu_custom_call.1} parent=43 // pred_fallthru
          _
        %250 = sfence
        %p251 = scmp.lt.s32.totalorder %s22, 1
        %s252 = scalar_select %p251, %s22, 1
        %p253 = scmp.lt.s32.totalorder %s23, 0
        %s254 = scalar_select %p253, %s23, 0
        %s255 = smul.addr %s252, 4
        %s256 = sadd.s32 %s254, %s255
        %s257 = smul.addr %s256, 4
        %s258 = scalar_lea.vmem %s0, %s257
        %p259 = pneg %p53
        %p260 = pneg %p50
        %p261 = pneg %p74
        %p262 = pneg %p71
        %p263 = pneg %p95
        %p264 = pneg %p92
        %p265 = pneg %p116
        %p266 = pneg %p113
        %p267 = pneg %p137
        %p268 = pneg %p134
        %p269 = pneg %p158
        %p270 = pneg %p155
        %p271 = pneg %p186
        %p272 = pneg %p183
        %p273 = scmp.lt.s32.totalorder %s22, 1
        %s274 = scalar_select %p273, %s22, 1
        %p275 = scmp.lt.s32.totalorder %s23, 0
        %s276 = scalar_select %p275, %s23, 0
        %s277 = smul.addr %s274, 4
        %s278 = sadd.s32 %s276, %s277
        %s279 = smul.addr %s278, 4
        %s280 = scalar_lea.vmem %s6, %s279
        %p281 = scmp.lt.s32.totalorder %s22, 1
        %s282 = scalar_select %p281, %s22, 1
        %p283 = scmp.lt.s32.totalorder %s23, 0
        %s284 = scalar_select %p283, %s23, 0
        %s285 = smul.addr %s282, 4
        %s286 = sadd.s32 %s284, %s285
        %s287 = smul.addr %s286, 4
        %s288 = scalar_lea.vmem %s0, %s287
        %p289 = scmp.lt.s32.totalorder %s22, 1
        %s290 = scalar_select %p289, %s22, 1
        %p291 = scmp.lt.s32.totalorder %s23, 0
        %s292 = scalar_select %p291, %s23, 0
        %s293 = smul.addr %s290, 4
        %s294 = sadd.s32 %s292, %s293
        %s295 = smul.addr %s294, 4
        %s296 = scalar_lea.vmem %s6, %s295
        %v298 = vld [vmem:[%s1] sm:$0xf]
        %v299 = vld [vmem:[%s1 + $0x4] sm:$0xf]
        %v300 = vld [vmem:[%s3] sm:$0xf]
        %v301 = vld [vmem:[%s3 + $0x4] sm:$0xf]
        %v302 = vld [vmem:[%s3 + $0x8] sm:$0xf]
        %v303 = vld [vmem:[%s3 + $0xc] sm:$0xf]
        %v304 = vld [vmem:[%s2] sm:$0xff]
        %v305 = vld [vmem:[%s2 + $0x8] sm:$0xff]
        %v306 = vld [vmem:[%s4] sm:$0xff]
        %v307 = vld [vmem:[%s4 + $0x8] sm:$0xff]
        %v308 = vld [vmem:[%s4 + $0x10] sm:$0xff]
        %v309 = vld [vmem:[%s4 + $0x18] sm:$0xff]
        %s310 = sld [smem:[#allocation3]]
        %s311 = sld [smem:[#allocation3 + $0x1]]
        %vm312 = vcmask 64512
        %313 = vst.msk [vmem:[#allocation2] sm:$0xff] %vm312, -inf
        %314 = vst.msk [vmem:[#allocation2 + $0x8] sm:$0xff] %vm312, -inf
        %315 = vst.msk [vmem:[#allocation2 + $0x10] sm:$0xff] %vm312, -inf
        %316 = vst.msk [vmem:[#allocation2 + $0x18] sm:$0xff] %vm312, -inf
        %v317 = vld [vmem:[%s288] sm:$0xf]
        %319 = vset.pattern.permute.xlu0 0
        %320 = vperm.xlu0 %319, %v304
        %v321 = vpop.permute.xlu0 %320
        %324 = vset.pattern.permute.xlu0 0
        %325 = vperm.xlu0 %324, %v305
        %v326 = vpop.permute.xlu0 %325
        %v330 = vunpack.c.l.b16 %v298
        %v331 = vunpack.c.l.b16 %v299
        %v332 = vpack.c.b16 %v331, %v330
        %vm333 = vcmask 56320
        %v335 = vsel %vm333, %v332, 0
        %vm337 = vcmask 1042432
        %vm338 = vcmask 1043456
        %v339 = vsel %vm337, 4294967295, 65535
        %v340 = vsel %vm338, %v339, 0
        %v342 = vand.u32 %v317, %v340
        %344 = vmatprep.subr.bf16.mxu0 0
        %345 = vmatpush1.bf16.msra.mxu0 0
        %346 = vmatprep.subr.bf16.mxu0 0
        %347 = vmatpush1.bf16.msra.mxu0 0
        %348 = vmatprep.subr.bf16.mxu0 0
        %349 = vmatpush1.bf16.msra.mxu0 0
        %350 = vmatprep.subr.bf16.mxu0 0
        %351 = vmatpush1.bf16.msra.mxu0 0
        %352 = vmatprep.subr.bf16.mxu0 0
        %353 = vmatpush1.bf16.msra.mxu0 0
        %354 = vmatprep.subr.bf16.mxu0 0
        %355 = vmatpush1.bf16.msra.mxu0 0
        %356 = vmatprep.subr.bf16.mxu0 0
        %357 = vmatpush1.bf16.msra.mxu0 0
        %358 = vmatprep.subr.bf16.mxu0 0
        %359 = vmatpush1.bf16.msra.mxu0 %v342
        %360 = vmatprep.subr.bf16.mxu0 0
        %361 = vmatpush2.bf16.msra.mxu0 0
        %362 = vmatprep.subr.bf16.mxu0 0
        %363 = vmatpush2.bf16.msra.mxu0 0
        %364 = vmatprep.subr.bf16.mxu0 0
        %365 = vmatpush2.bf16.msra.mxu0 0
        %366 = vmatprep.subr.bf16.mxu0 0
        %367 = vmatpush2.bf16.msra.mxu0 0
        %368 = vmatprep.subr.bf16.mxu0 0
        %369 = vmatpush2.bf16.msra.mxu0 0
        %370 = vmatprep.subr.bf16.mxu0 0
        %371 = vmatpush2.bf16.msra.mxu0 0
        %372 = vmatprep.subr.bf16.mxu0 0
        %373 = vmatpush2.bf16.msra.mxu0 0
        %374 = vmatprep.subr.bf16.mxu0 0
        %375 = vmatpush2.bf16.msra.mxu0 0
        %376 = vmatprep.mubr.bf16.mxu0 0
        %377 = vmatmul.mubr.bf16.gmra.mxu0 %v335
        %v378 = vpop.f32.mrf.mxu0
        %v379 = vadd.f32 %v321, %v378
        %v380 = vpop.f32.mrf.mxu0
        %v381 = vpop.f32.mrf.mxu0
        %v382 = vadd.f32 %v326, %v381
        %v383 = vpop.f32.mrf.mxu0
        %384 = vdwg.mxu0
        %vm385 = vcmp.gt.f32.partialorder %v379, 0.0
        %vm386 = vcmp.gt.f32.partialorder %v382, 0.0
        %v387 = vstv %s310
        %v388 = vmul.f32 %v387, %v379
        %v389 = vmul.f32 %v387, %v382
        %v390 = vsel %vm385, %v379, %v388
        %v391 = vsel %vm386, %v382, %v389
        %v392 = vpack.c.bf16 %v391, %v390
        %394 = vset.pattern.permute.xlu0 0
        %395 = vperm.xlu0 %394, %v306
        %v396 = vpop.permute.xlu0 %395
        %399 = vset.pattern.permute.xlu0 0
        %400 = vperm.xlu0 %399, %v307
        %v401 = vpop.permute.xlu0 %400
        %404 = vset.pattern.permute.xlu0 0
        %405 = vperm.xlu0 %404, %v308
        %v406 = vpop.permute.xlu0 %405
        %409 = vset.pattern.permute.xlu0 0
        %410 = vperm.xlu0 %409, %v309
        %v411 = vpop.permute.xlu0 %410
        %v417 = vunpack.c.l.b16 %v300
        %v418 = vunpack.c.l.b16 %v301
        %v419 = vunpack.c.l.b16 %v302
        %v420 = vunpack.c.l.b16 %v303
        %v421 = vpack.c.b16 %v418, %v417
        %v422 = vpack.c.b16 %v420, %v419
        %vm423 = vcmask 130048
        %v425 = vsel %vm423, %v421, 0
        %v428 = vsel %vm423, %v422, 0
        %430 = vmatprep.subr.bf16.mxu0 0
        %431 = vmatpush1.bf16.msra.mxu0 0
        %432 = vmatprep.subr.bf16.mxu0 0
        %433 = vmatpush1.bf16.msra.mxu0 0
        %434 = vmatprep.subr.bf16.mxu0 0
        %435 = vmatpush1.bf16.msra.mxu0 0
        %436 = vmatprep.subr.bf16.mxu0 0
        %437 = vmatpush1.bf16.msra.mxu0 0
        %438 = vmatprep.subr.bf16.mxu0 0
        %439 = vmatpush1.bf16.msra.mxu0 0
        %440 = vmatprep.subr.bf16.mxu0 0
        %441 = vmatpush1.bf16.msra.mxu0 0
        %442 = vmatprep.subr.bf16.mxu0 0
        %443 = vmatpush1.bf16.msra.mxu0 0
        %444 = vmatprep.subr.bf16.mxu0 0
        %445 = vmatpush1.bf16.msra.mxu0 %v392
        %446 = vmatprep.subr.bf16.mxu0 0
        %447 = vmatpush2.bf16.msra.mxu0 0
        %448 = vmatprep.subr.bf16.mxu0 0
        %449 = vmatpush2.bf16.msra.mxu0 0
        %450 = vmatprep.subr.bf16.mxu0 0
        %451 = vmatpush2.bf16.msra.mxu0 0
        %452 = vmatprep.subr.bf16.mxu0 0
        %453 = vmatpush2.bf16.msra.mxu0 0
        %454 = vmatprep.subr.bf16.mxu0 0
        %455 = vmatpush2.bf16.msra.mxu0 0
        %456 = vmatprep.subr.bf16.mxu0 0
        %457 = vmatpush2.bf16.msra.mxu0 0
        %458 = vmatprep.subr.bf16.mxu0 0
        %459 = vmatpush2.bf16.msra.mxu0 0
        %460 = vmatprep.subr.bf16.mxu0 0
        %461 = vmatpush2.bf16.msra.mxu0 0
        %462 = vmatprep.mubr.bf16.mxu0 0
        %463 = vmatmul.mubr.bf16.gmra.mxu0 %v425
        %v464 = vpop.f32.mrf.mxu0
        %v465 = vadd.f32 %v396, %v464
        %v466 = vpop.f32.mrf.mxu0
        %v467 = vpop.f32.mrf.mxu0
        %v468 = vadd.f32 %v401, %v467
        %v469 = vpop.f32.mrf.mxu0
        %470 = vmatprep.mubr.bf16.mxu0 0
        %471 = vmatmul.mubr.bf16.gmra.mxu0 %v428
        %v472 = vpop.f32.mrf.mxu0
        %v473 = vadd.f32 %v406, %v472
        %v474 = vpop.f32.mrf.mxu0
        %v475 = vpop.f32.mrf.mxu0
        %v476 = vadd.f32 %v411, %v475
        %v477 = vpop.f32.mrf.mxu0
        %478 = vdwg.mxu0
        %vm479 = vcmp.gt.f32.partialorder %v465, 0.0
        %vm480 = vcmp.gt.f32.partialorder %v468, 0.0
        %vm481 = vcmp.gt.f32.partialorder %v473, 0.0
        %vm482 = vcmp.gt.f32.partialorder %v476, 0.0
        %v483 = vstv %s311
        %v484 = vmul.f32 %v483, %v465
        %v485 = vmul.f32 %v483, %v468
        %v486 = vmul.f32 %v483, %v473
        %v487 = vmul.f32 %v483, %v476
        %v488 = vsel %vm479, %v465, %v484
        %v489 = vsel %vm480, %v468, %v485
        %v490 = vsel %vm481, %v473, %v486
        %v491 = vsel %vm482, %v476, %v487
        %v492 = vld [vmem:[#allocation2] sm:$0xff]
        %v493 = vld [vmem:[#allocation2 + $0x8] sm:$0xff]
        %v494 = vld [vmem:[#allocation2 + $0x10] sm:$0xff]
        %v495 = vld [vmem:[#allocation2 + $0x18] sm:$0xff]
        %v496 = vmax.f32 %v492, %v488
        %v497 = vmax.f32 %v493, %v489
        %v498 = vmax.f32 %v494, %v490
        %v499 = vmax.f32 %v495, %v491
        %500 = vst.msk [vmem:[#allocation2] sm:$0xff] %vm312, %v496
        %501 = vst.msk [vmem:[#allocation2 + $0x8] sm:$0xff] %vm312, %v497
        %502 = vst.msk [vmem:[#allocation2 + $0x10] sm:$0xff] %vm312, %v498
        %503 = vst.msk [vmem:[#allocation2 + $0x18] sm:$0xff] %vm312, %v499
        %s504 = scalar_lea.vmem %s288, 4
        %v505 = vld [vmem:[%s504] sm:$0xf]
        %v507 = vand.u32 %v505, %v340
        %509 = vmatprep.subr.bf16.mxu0 0
        %510 = vmatpush1.bf16.msra.mxu0 0
        %511 = vmatprep.subr.bf16.mxu0 0
        %512 = vmatpush1.bf16.msra.mxu0 0
        %513 = vmatprep.subr.bf16.mxu0 0
        %514 = vmatpush1.bf16.msra.mxu0 0
        %515 = vmatprep.subr.bf16.mxu0 0
        %516 = vmatpush1.bf16.msra.mxu0 0
        %517 = vmatprep.subr.bf16.mxu0 0
        %518 = vmatpush1.bf16.msra.mxu0 0
        %519 = vmatprep.subr.bf16.mxu0 0
        %520 = vmatpush1.bf16.msra.mxu0 0
        %521 = vmatprep.subr.bf16.mxu0 0
        %522 = vmatpush1.bf16.msra.mxu0 0
        %523 = vmatprep.subr.bf16.mxu0 0
        %524 = vmatpush1.bf16.msra.mxu0 %v507
        %525 = vmatprep.subr.bf16.mxu0 0
        %526 = vmatpush2.bf16.msra.mxu0 0
        %527 = vmatprep.subr.bf16.mxu0 0
        %528 = vmatpush2.bf16.msra.mxu0 0
        %529 = vmatprep.subr.bf16.mxu0 0
        %530 = vmatpush2.bf16.msra.mxu0 0
        %531 = vmatprep.subr.bf16.mxu0 0
        %532 = vmatpush2.bf16.msra.mxu0 0
        %533 = vmatprep.subr.bf16.mxu0 0
        %534 = vmatpush2.bf16.msra.mxu0 0
        %535 = vmatprep.subr.bf16.mxu0 0
        %536 = vmatpush2.bf16.msra.mxu0 0
        %537 = vmatprep.subr.bf16.mxu0 0
        %538 = vmatpush2.bf16.msra.mxu0 0
        %539 = vmatprep.subr.bf16.mxu0 0
        %540 = vmatpush2.bf16.msra.mxu0 0
        %541 = vmatprep.mubr.bf16.mxu0 0
        %542 = vmatmul.mubr.bf16.gmra.mxu0 %v335
        %v543 = vpop.f32.mrf.mxu0
        %v544 = vadd.f32 %v321, %v543
        %v545 = vpop.f32.mrf.mxu0
        %v546 = vpop.f32.mrf.mxu0
        %v547 = vadd.f32 %v326, %v546
        %v548 = vpop.f32.mrf.mxu0
        %549 = vdwg.mxu0
        %vm550 = vcmp.gt.f32.partialorder %v544, 0.0
        %vm551 = vcmp.gt.f32.partialorder %v547, 0.0
        %v552 = vmul.f32 %v387, %v544
        %v553 = vmul.f32 %v387, %v547
        %v554 = vsel %vm550, %v544, %v552
        %v555 = vsel %vm551, %v547, %v553
        %v556 = vpack.c.bf16 %v555, %v554
        %557 = vmatprep.subr.bf16.mxu0 0
        %558 = vmatpush1.bf16.msra.mxu0 0
        %559 = vmatprep.subr.bf16.mxu0 0
        %560 = vmatpush1.bf16.msra.mxu0 0
        %561 = vmatprep.subr.bf16.mxu0 0
        %562 = vmatpush1.bf16.msra.mxu0 0
        %563 = vmatprep.subr.bf16.mxu0 0
        %564 = vmatpush1.bf16.msra.mxu0 0
        %565 = vmatprep.subr.bf16.mxu0 0
        %566 = vmatpush1.bf16.msra.mxu0 0
        %567 = vmatprep.subr.bf16.mxu0 0
        %568 = vmatpush1.bf16.msra.mxu0 0
        %569 = vmatprep.subr.bf16.mxu0 0
        %570 = vmatpush1.bf16.msra.mxu0 0
        %571 = vmatprep.subr.bf16.mxu0 0
        %572 = vmatpush1.bf16.msra.mxu0 %v556
        %573 = vmatprep.subr.bf16.mxu0 0
        %574 = vmatpush2.bf16.msra.mxu0 0
        %575 = vmatprep.subr.bf16.mxu0 0
        %576 = vmatpush2.bf16.msra.mxu0 0
        %577 = vmatprep.subr.bf16.mxu0 0
        %578 = vmatpush2.bf16.msra.mxu0 0
        %579 = vmatprep.subr.bf16.mxu0 0
        %580 = vmatpush2.bf16.msra.mxu0 0
        %581 = vmatprep.subr.bf16.mxu0 0
        %582 = vmatpush2.bf16.msra.mxu0 0
        %583 = vmatprep.subr.bf16.mxu0 0
        %584 = vmatpush2.bf16.msra.mxu0 0
        %585 = vmatprep.subr.bf16.mxu0 0
        %586 = vmatpush2.bf16.msra.mxu0 0
        %587 = vmatprep.subr.bf16.mxu0 0
        %588 = vmatpush2.bf16.msra.mxu0 0
        %589 = vmatprep.mubr.bf16.mxu0 0
        %590 = vmatmul.mubr.bf16.gmra.mxu0 %v425
        %v591 = vpop.f32.mrf.mxu0
        %v592 = vadd.f32 %v396, %v591
        %v593 = vpop.f32.mrf.mxu0
        %v594 = vpop.f32.mrf.mxu0
        %v595 = vadd.f32 %v401, %v594
        %v596 = vpop.f32.mrf.mxu0
        %597 = vmatprep.mubr.bf16.mxu0 0
        %598 = vmatmul.mubr.bf16.gmra.mxu0 %v428
        %v599 = vpop.f32.mrf.mxu0
        %v600 = vadd.f32 %v406, %v599
        %v601 = vpop.f32.mrf.mxu0
        %v602 = vpop.f32.mrf.mxu0
        %v603 = vadd.f32 %v411, %v602
        %v604 = vpop.f32.mrf.mxu0
        %605 = vdwg.mxu0
        %vm606 = vcmp.gt.f32.partialorder %v592, 0.0
        %vm607 = vcmp.gt.f32.partialorder %v595, 0.0
        %vm608 = vcmp.gt.f32.partialorder %v600, 0.0
        %vm609 = vcmp.gt.f32.partialorder %v603, 0.0
        %v610 = vmul.f32 %v483, %v592
        %v611 = vmul.f32 %v483, %v595
        %v612 = vmul.f32 %v483, %v600
        %v613 = vmul.f32 %v483, %v603
        %v614 = vsel %vm606, %v592, %v610
        %v615 = vsel %vm607, %v595, %v611
        %v616 = vsel %vm608, %v600, %v612
        %v617 = vsel %vm609, %v603, %v613
        %v618 = vld [vmem:[#allocation2] sm:$0xff]
        %v619 = vld [vmem:[#allocation2 + $0x8] sm:$0xff]
        %v620 = vld [vmem:[#allocation2 + $0x10] sm:$0xff]
        %v621 = vld [vmem:[#allocation2 + $0x18] sm:$0xff]
        %v622 = vmax.f32 %v618, %v614
        %v623 = vmax.f32 %v619, %v615
        %v624 = vmax.f32 %v620, %v616
        %v625 = vmax.f32 %v621, %v617
        %626 = vst.msk [vmem:[#allocation2] sm:$0xff] %vm312, %v622
        %627 = vst.msk [vmem:[#allocation2 + $0x8] sm:$0xff] %vm312, %v623
        %628 = vst.msk [vmem:[#allocation2 + $0x10] sm:$0xff] %vm312, %v624
        %629 = vst.msk [vmem:[#allocation2 + $0x18] sm:$0xff] %vm312, %v625
        %s630 = scalar_lea.vmem %s288, 8
        %v631 = vld [vmem:[%s630] sm:$0xf]
        %v633 = vand.u32 %v631, %v340
        %635 = vmatprep.subr.bf16.mxu0 0
        %636 = vmatpush1.bf16.msra.mxu0 0
        %637 = vmatprep.subr.bf16.mxu0 0
        %638 = vmatpush1.bf16.msra.mxu0 0
        %639 = vmatprep.subr.bf16.mxu0 0
        %640 = vmatpush1.bf16.msra.mxu0 0
        %641 = vmatprep.subr.bf16.mxu0 0
        %642 = vmatpush1.bf16.msra.mxu0 0
        %643 = vmatprep.subr.bf16.mxu0 0
        %644 = vmatpush1.bf16.msra.mxu0 0
        %645 = vmatprep.subr.bf16.mxu0 0
        %646 = vmatpush1.bf16.msra.mxu0 0
        %647 = vmatprep.subr.bf16.mxu0 0
        %648 = vmatpush1.bf16.msra.mxu0 0
        %649 = vmatprep.subr.bf16.mxu0 0
        %650 = vmatpush1.bf16.msra.mxu0 %v633
        %651 = vmatprep.subr.bf16.mxu0 0
        %652 = vmatpush2.bf16.msra.mxu0 0
        %653 = vmatprep.subr.bf16.mxu0 0
        %654 = vmatpush2.bf16.msra.mxu0 0
        %655 = vmatprep.subr.bf16.mxu0 0
        %656 = vmatpush2.bf16.msra.mxu0 0
        %657 = vmatprep.subr.bf16.mxu0 0
        %658 = vmatpush2.bf16.msra.mxu0 0
        %659 = vmatprep.subr.bf16.mxu0 0
        %660 = vmatpush2.bf16.msra.mxu0 0
        %661 = vmatprep.subr.bf16.mxu0 0
        %662 = vmatpush2.bf16.msra.mxu0 0
        %663 = vmatprep.subr.bf16.mxu0 0
        %664 = vmatpush2.bf16.msra.mxu0 0
        %665 = vmatprep.subr.bf16.mxu0 0
        %666 = vmatpush2.bf16.msra.mxu0 0
        %667 = vmatprep.mubr.bf16.mxu0 0
        %668 = vmatmul.mubr.bf16.gmra.mxu0 %v335
        %v669 = vpop.f32.mrf.mxu0
        %v670 = vadd.f32 %v321, %v669
        %v671 = vpop.f32.mrf.mxu0
        %v672 = vpop.f32.mrf.mxu0
        %v673 = vadd.f32 %v326, %v672
        %v674 = vpop.f32.mrf.mxu0
        %675 = vdwg.mxu0
        %vm676 = vcmp.gt.f32.partialorder %v670, 0.0
        %vm677 = vcmp.gt.f32.partialorder %v673, 0.0
        %v678 = vmul.f32 %v387, %v670
        %v679 = vmul.f32 %v387, %v673
        %v680 = vsel %vm676, %v670, %v678
        %v681 = vsel %vm677, %v673, %v679
        %v682 = vpack.c.bf16 %v681, %v680
        %683 = vmatprep.subr.bf16.mxu0 0
        %684 = vmatpush1.bf16.msra.mxu0 0
        %685 = vmatprep.subr.bf16.mxu0 0
        %686 = vmatpush1.bf16.msra.mxu0 0
        %687 = vmatprep.subr.bf16.mxu0 0
        %688 = vmatpush1.bf16.msra.mxu0 0
        %689 = vmatprep.subr.bf16.mxu0 0
        %690 = vmatpush1.bf16.msra.mxu0 0
        %691 = vmatprep.subr.bf16.mxu0 0
        %692 = vmatpush1.bf16.msra.mxu0 0
        %693 = vmatprep.subr.bf16.mxu0 0
        %694 = vmatpush1.bf16.msra.mxu0 0
        %695 = vmatprep.subr.bf16.mxu0 0
        %696 = vmatpush1.bf16.msra.mxu0 0
        %697 = vmatprep.subr.bf16.mxu0 0
        %698 = vmatpush1.bf16.msra.mxu0 %v682
        %699 = vmatprep.subr.bf16.mxu0 0
        %700 = vmatpush2.bf16.msra.mxu0 0
        %701 = vmatprep.subr.bf16.mxu0 0
        %702 = vmatpush2.bf16.msra.mxu0 0
        %703 = vmatprep.subr.bf16.mxu0 0
        %704 = vmatpush2.bf16.msra.mxu0 0
        %705 = vmatprep.subr.bf16.mxu0 0
        %706 = vmatpush2.bf16.msra.mxu0 0
        %707 = vmatprep.subr.bf16.mxu0 0
        %708 = vmatpush2.bf16.msra.mxu0 0
        %709 = vmatprep.subr.bf16.mxu0 0
        %710 = vmatpush2.bf16.msra.mxu0 0
        %711 = vmatprep.subr.bf16.mxu0 0
        %712 = vmatpush2.bf16.msra.mxu0 0
        %713 = vmatprep.subr.bf16.mxu0 0
        %714 = vmatpush2.bf16.msra.mxu0 0
        %715 = vmatprep.mubr.bf16.mxu0 0
        %716 = vmatmul.mubr.bf16.gmra.mxu0 %v425
        %v717 = vpop.f32.mrf.mxu0
        %v718 = vadd.f32 %v396, %v717
        %v719 = vpop.f32.mrf.mxu0
        %v720 = vpop.f32.mrf.mxu0
        %v721 = vadd.f32 %v401, %v720
        %v722 = vpop.f32.mrf.mxu0
        %723 = vmatprep.mubr.bf16.mxu0 0
        %724 = vmatmul.mubr.bf16.gmra.mxu0 %v428
        %v725 = vpop.f32.mrf.mxu0
        %v726 = vadd.f32 %v406, %v725
        %v727 = vpop.f32.mrf.mxu0
        %v728 = vpop.f32.mrf.mxu0
        %v729 = vadd.f32 %v411, %v728
        %v730 = vpop.f32.mrf.mxu0
        %731 = vdwg.mxu0
        %vm732 = vcmp.gt.f32.partialorder %v718, 0.0
        %vm733 = vcmp.gt.f32.partialorder %v721, 0.0
        %vm734 = vcmp.gt.f32.partialorder %v726, 0.0
        %vm735 = vcmp.gt.f32.partialorder %v729, 0.0
        %v736 = vmul.f32 %v483, %v718
        %v737 = vmul.f32 %v483, %v721
        %v738 = vmul.f32 %v483, %v726
        %v739 = vmul.f32 %v483, %v729
        %v740 = vsel %vm732, %v718, %v736
        %v741 = vsel %vm733, %v721, %v737
        %v742 = vsel %vm734, %v726, %v738
        %v743 = vsel %vm735, %v729, %v739
        %v744 = vld [vmem:[#allocation2] sm:$0xff]
        %v745 = vld [vmem:[#allocation2 + $0x8] sm:$0xff]
        %v746 = vld [vmem:[#allocation2 + $0x10] sm:$0xff]
        %v747 = vld [vmem:[#allocation2 + $0x18] sm:$0xff]
        %v748 = vmax.f32 %v744, %v740
        %v749 = vmax.f32 %v745, %v741
        %v750 = vmax.f32 %v746, %v742
        %v751 = vmax.f32 %v747, %v743
        %752 = vst.msk [vmem:[#allocation2] sm:$0xff] %vm312, %v748
        %753 = vst.msk [vmem:[#allocation2 + $0x8] sm:$0xff] %vm312, %v749
        %754 = vst.msk [vmem:[#allocation2 + $0x10] sm:$0xff] %vm312, %v750
        %755 = vst.msk [vmem:[#allocation2 + $0x18] sm:$0xff] %vm312, %v751
        %s756 = scalar_lea.vmem %s288, 12
        %v757 = vld [vmem:[%s756] sm:$0xf]
        %v759 = vand.u32 %v757, %v340
        %761 = vmatprep.subr.bf16.mxu0 0
        %762 = vmatpush1.bf16.msra.mxu0 0
        %763 = vmatprep.subr.bf16.mxu0 0
        %764 = vmatpush1.bf16.msra.mxu0 0
        %765 = vmatprep.subr.bf16.mxu0 0
        %766 = vmatpush1.bf16.msra.mxu0 0
        %767 = vmatprep.subr.bf16.mxu0 0
        %768 = vmatpush1.bf16.msra.mxu0 0
        %769 = vmatprep.subr.bf16.mxu0 0
        %770 = vmatpush1.bf16.msra.mxu0 0
        %771 = vmatprep.subr.bf16.mxu0 0
        %772 = vmatpush1.bf16.msra.mxu0 0
        %773 = vmatprep.subr.bf16.mxu0 0
        %774 = vmatpush1.bf16.msra.mxu0 0
        %775 = vmatprep.subr.bf16.mxu0 0
        %776 = vmatpush1.bf16.msra.mxu0 %v759
        %777 = vmatprep.subr.bf16.mxu0 0
        %778 = vmatpush2.bf16.msra.mxu0 0
        %779 = vmatprep.subr.bf16.mxu0 0
        %780 = vmatpush2.bf16.msra.mxu0 0
        %781 = vmatprep.subr.bf16.mxu0 0
        %782 = vmatpush2.bf16.msra.mxu0 0
        %783 = vmatprep.subr.bf16.mxu0 0
        %784 = vmatpush2.bf16.msra.mxu0 0
        %785 = vmatprep.subr.bf16.mxu0 0
        %786 = vmatpush2.bf16.msra.mxu0 0
        %787 = vmatprep.subr.bf16.mxu0 0
        %788 = vmatpush2.bf16.msra.mxu0 0
        %789 = vmatprep.subr.bf16.mxu0 0
        %790 = vmatpush2.bf16.msra.mxu0 0
        %791 = vmatprep.subr.bf16.mxu0 0
        %792 = vmatpush2.bf16.msra.mxu0 0
        %793 = vmatprep.mubr.bf16.mxu0 0
        %794 = vmatmul.mubr.bf16.gmra.mxu0 %v335
        %v795 = vpop.f32.mrf.mxu0
        %v796 = vadd.f32 %v321, %v795
        %v797 = vpop.f32.mrf.mxu0
        %v798 = vpop.f32.mrf.mxu0
        %v799 = vadd.f32 %v326, %v798
        %v800 = vpop.f32.mrf.mxu0
        %801 = vdwg.mxu0
        %vm802 = vcmp.gt.f32.partialorder %v796, 0.0
        %vm803 = vcmp.gt.f32.partialorder %v799, 0.0
        %v804 = vmul.f32 %v387, %v796
        %v805 = vmul.f32 %v387, %v799
        %v806 = vsel %vm802, %v796, %v804
        %v807 = vsel %vm803, %v799, %v805
        %v808 = vpack.c.bf16 %v807, %v806
        %809 = vmatprep.subr.bf16.mxu0 0
        %810 = vmatpush1.bf16.msra.mxu0 0
        %811 = vmatprep.subr.bf16.mxu0 0
        %812 = vmatpush1.bf16.msra.mxu0 0
        %813 = vmatprep.subr.bf16.mxu0 0
        %814 = vmatpush1.bf16.msra.mxu0 0
        %815 = vmatprep.subr.bf16.mxu0 0
        %816 = vmatpush1.bf16.msra.mxu0 0
        %817 = vmatprep.subr.bf16.mxu0 0
        %818 = vmatpush1.bf16.msra.mxu0 0
        %819 = vmatprep.subr.bf16.mxu0 0
        %820 = vmatpush1.bf16.msra.mxu0 0
        %821 = vmatprep.subr.bf16.mxu0 0
        %822 = vmatpush1.bf16.msra.mxu0 0
        %823 = vmatprep.subr.bf16.mxu0 0
        %824 = vmatpush1.bf16.msra.mxu0 %v808
        %825 = vmatprep.subr.bf16.mxu0 0
        %826 = vmatpush2.bf16.msra.mxu0 0
        %827 = vmatprep.subr.bf16.mxu0 0
        %828 = vmatpush2.bf16.msra.mxu0 0
        %829 = vmatprep.subr.bf16.mxu0 0
        %830 = vmatpush2.bf16.msra.mxu0 0
        %831 = vmatprep.subr.bf16.mxu0 0
        %832 = vmatpush2.bf16.msra.mxu0 0
        %833 = vmatprep.subr.bf16.mxu0 0
        %834 = vmatpush2.bf16.msra.mxu0 0
        %835 = vmatprep.subr.bf16.mxu0 0
        %836 = vmatpush2.bf16.msra.mxu0 0
        %837 = vmatprep.subr.bf16.mxu0 0
        %838 = vmatpush2.bf16.msra.mxu0 0
        %839 = vmatprep.subr.bf16.mxu0 0
        %840 = vmatpush2.bf16.msra.mxu0 0
        %841 = vmatprep.mubr.bf16.mxu0 0
        %842 = vmatmul.mubr.bf16.gmra.mxu0 %v425
        %v843 = vpop.f32.mrf.mxu0
        %v844 = vadd.f32 %v396, %v843
        %v845 = vpop.f32.mrf.mxu0
        %v846 = vpop.f32.mrf.mxu0
        %v847 = vadd.f32 %v401, %v846
        %v848 = vpop.f32.mrf.mxu0
        %849 = vmatprep.mubr.bf16.mxu0 0
        %850 = vmatmul.mubr.bf16.gmra.mxu0 %v428
        %v851 = vpop.f32.mrf.mxu0
        %v852 = vadd.f32 %v406, %v851
        %v853 = vpop.f32.mrf.mxu0
        %v854 = vpop.f32.mrf.mxu0
        %v855 = vadd.f32 %v411, %v854
        %v856 = vpop.f32.mrf.mxu0
        %857 = vdwg.mxu0
        %vm858 = vcmp.gt.f32.partialorder %v844, 0.0
        %vm859 = vcmp.gt.f32.partialorder %v847, 0.0
        %vm860 = vcmp.gt.f32.partialorder %v852, 0.0
        %vm861 = vcmp.gt.f32.partialorder %v855, 0.0
        %v862 = vmul.f32 %v483, %v844
        %v863 = vmul.f32 %v483, %v847
        %v864 = vmul.f32 %v483, %v852
        %v865 = vmul.f32 %v483, %v855
        %v866 = vsel %vm858, %v844, %v862
        %v867 = vsel %vm859, %v847, %v863
        %v868 = vsel %vm860, %v852, %v864
        %v869 = vsel %vm861, %v855, %v865
        %v870 = vld [vmem:[#allocation2] sm:$0xff]
        %v871 = vld [vmem:[#allocation2 + $0x8] sm:$0xff]
        %v872 = vld [vmem:[#allocation2 + $0x10] sm:$0xff]
        %v873 = vld [vmem:[#allocation2 + $0x18] sm:$0xff]
        %v874 = vmax.f32 %v870, %v866
        %v875 = vmax.f32 %v871, %v867
        %v876 = vmax.f32 %v872, %v868
        %v877 = vmax.f32 %v873, %v869
        %878 = vst.msk [vmem:[#allocation2] sm:$0xff] %vm312, %v874
        %879 = vst.msk [vmem:[#allocation2 + $0x8] sm:$0xff] %vm312, %v875
        %880 = vst.msk [vmem:[#allocation2 + $0x10] sm:$0xff] %vm312, %v876
        %881 = vst.msk [vmem:[#allocation2 + $0x18] sm:$0xff] %vm312, %v877
        %v882 = vld [vmem:[#allocation2] sm:$0xff]
        %v883 = vld [vmem:[#allocation2 + $0x8] sm:$0xff]
        %v884 = vld [vmem:[#allocation2 + $0x10] sm:$0xff]
        %v885 = vld [vmem:[#allocation2 + $0x18] sm:$0xff]
        %v886 = vpack.c.bf16 %v883, %v882
        %v887 = vpack.c.bf16 %v885, %v884
        %v890 = vunpack.c.l.b16 %v886
        %v891 = vunpack.c.h.b16 %v886
        %v892 = vunpack.c.l.b16 %v887
        %v893 = vunpack.c.h.b16 %v887
        %v894 = vpack.c.b16 %v890, %v890
        %v895 = vpack.c.b16 %v891, %v891
        %v896 = vpack.c.b16 %v892, %v892
        %v897 = vpack.c.b16 %v893, %v893
        %vm902 = vcmask 60416
        %903 = vst.msk [vmem:[%s296] sm:$0xf] %vm902, %v894
        %904 = vst.msk [vmem:[%s296 + $0x4] sm:$0xf] %vm902, %v895
        %905 = vst.msk [vmem:[%s296 + $0x8] sm:$0xf] %vm902, %v896
        %906 = vst.msk [vmem:[%s296 + $0xc] sm:$0xf] %vm902, %v897
        %p907 = scmp.lt.s32.totalorder %s22, 1
        %s908 = scalar_select %p907, %s22, 1
        %p909 = scmp.lt.s32.totalorder %s23, 0
        %s910 = scalar_select %p909, %s23, 0
        %s911 = smul.addr %s908, 4
        %s912 = sadd.s32 %s910, %s911
        %s913 = smul.addr %s912, 4
        %s914 = scalar_lea.vmem %s6, %s913
        // Predicated region
        $region49: #{tpu_custom_call.1} parent=43 // pred_check
          %p915 = pneg %p183
        $region50: #{tpu_custom_call.1} parent=43 // pred_check_branch
          %917 = sbr.rel (%p915) target = $region52
        $region51: #{tpu_custom_call.1} parent=43 // pred_region
          _
        $region52: #{tpu_custom_call.1} parent=43 // pred_fallthru
          _
      $region44: #{tpu_custom_call.1} parent=5 // pred_fallthru
        _
      %p918 = scmp.le.s32.totalorder 2, %s13
      // Predicated region
      $region53: #{tpu_custom_call.1} parent=5 // pred_check
        %p919 = pneg %p918
      $region54: #{tpu_custom_call.1} parent=5 // pred_check_branch
        %921 = sbr.rel (%p919) target = $region56
      $region55: #{tpu_custom_call.1} parent=5 // pred_region
        %s922 = ssub.s32 %s13, 2
        // Predicated region
        $region57: #{tpu_custom_call.1} parent=55 // pred_check
          %p923 = pneg %p189
        $region58: #{tpu_custom_call.1} parent=55 // pred_check_branch
          %925 = sbr.rel (%p923) target = $region60
        $region59: #{tpu_custom_call.1} parent=55 // pred_region
          %p926 = scmp.lt.s32.totalorder %s24, 1
          %s927 = scalar_select %p926, %s24, 1
          %p928 = scmp.lt.s32.totalorder %s25, 0
          %s929 = scalar_select %p928, %s25, 0
          %s930 = smul.addr %s927, 4
          %s931 = sadd.s32 %s929, %s930
          %s932 = smul.addr %s931, 4
          %s933 = scalar_lea.vmem %s6, %s932
        $region60: #{tpu_custom_call.1} parent=55 // pred_fallthru
          _
      $region56: #{tpu_custom_call.1} parent=5 // pred_fallthru
        _
    $region6: #{tpu_custom_call.1} parent=1 // loop_footer
      %s17 = sadd.s32 1, %s13
    $region7: #{tpu_custom_call.1} parent=1 // loop_footer_branch
      %12 = sbr.rel target = $region3
    $region8: #{tpu_custom_call.1} parent=1 // loop_exit
      _
    %934 = vsyncpa [#allocation4], 1
    %s935 = scalar_lea.sflag [#allocation4], 1
    %936 = vsyncpa %s935, 1

</llo_original>
